<compile_context>
chip_gen: v7x
topology: tpu7x:2x2x1
jax: 0.10.0
libtpu: 0.0.40
codegen_flags: <defaults>
</compile_context>

<pallas_src>
import jax
import jax.numpy as jnp
from jax.experimental import pallas as pl
from jax.experimental.pallas import tpu as pltpu


# ---------------------------------------------------------------------------
# Kernel
# ---------------------------------------------------------------------------
def wordlstm_kernel(ids_ref, h_ref, c_ref, table_ref,
                    wtop_ref, wbot_ref, b_ref, out_ref):
    R = ids_ref.shape[0]          # rows per step = words_per_block * batch
    V = table_ref.shape[0]        # word-vocab size
    H = out_ref.shape[-1]         # hidden dim
    cdt = wtop_ref.dtype          # MXU operand dtype (f32 or bf16)

    # In-kernel embedding gather via one-hot matmul on the MXU (table lives in
    # VMEM). Note: out-of-range ids yield a zero embedding here, whereas
    # nn.Embedding / jnp.take would clamp; test ids are always in range.
    ids = ids_ref[...]                                            # (R, 1) i32
    iota = jax.lax.broadcasted_iota(jnp.int32, (R, V), 1)
    onehot = (iota == ids).astype(jnp.float32)                    # (R, V)
    emb = jnp.dot(onehot, table_ref[...],
                  preferred_element_type=jnp.float32)             # (R, E) f32

    # Fused gate pre-activations: [emb | h] @ [W_i | W_f | W_c] + [b_i|b_f|b_c],
    # done as two accumulating dots (avoids an in-kernel concat copy), f32 acc.
    gates = jnp.dot(emb.astype(cdt), wtop_ref[...],
                    preferred_element_type=jnp.float32)
    gates = gates + jnp.dot(h_ref[...].astype(cdt), wbot_ref[...],
                            preferred_element_type=jnp.float32)
    gates = gates + b_ref[...]                                    # (R, 3H_padded)

    # Gate nonlinearities + cell-state update in f32 (v5e has no bf16 VPU/EUP).
    i_g = jax.nn.sigmoid(gates[:, 0:H])
    f_g = jax.nn.sigmoid(gates[:, H:2 * H])
    c_bar = jnp.tanh(gates[:, 2 * H:3 * H])
    out_ref[...] = f_g * c_ref[...] + i_g * c_bar                 # (R, H) f32


# ---------------------------------------------------------------------------
# Host-side wrappers
# ---------------------------------------------------------------------------
def pack_params(params, compute_dtype=jnp.float32):
    """Fuse the three gate weights/biases and pad the gate axis to 128 lanes."""
    w = jnp.concatenate([params["w_i"], params["w_f"], params["w_c"]], axis=1)  # (E+H, 3H)
    b = jnp.concatenate([params["b_i"], params["b_f"], params["b_c"]], axis=1)  # (1,  3H)
    E = params["word_embeds"].shape[1]
    G = w.shape[1]
    Gp = ((G + 127) // 128) * 128          # lane-dense gate slab
    w = jnp.pad(w, ((0, 0), (0, Gp - G)))
    b = jnp.pad(b, ((0, 0), (0, Gp - G)))
    return {
        "table": params["word_embeds"].astype(jnp.float32),   # (V, E), exact gather
        "w_top": w[:E].astype(compute_dtype),                 # multiplies emb
        "w_bot": w[E:].astype(compute_dtype),                 # multiplies h
        "b": b.astype(jnp.float32),                           # (1, Gp)
    }


def word_lstm_forward_words(x_ids, h, c, packed, *, words_per_block=1):
    """Batched-over-words forward (amortizes weight DMA + launch cost).

    x_ids: (W, B) int32   — one word id row per lattice word
    h, c : (W, B, H) f32  — per-word incoming hidden / cell state
    returns (W, B, H) f32 word_cell_state
    """
    W, B = x_ids.shape
    H = h.shape[-1]
    if W % words_per_block != 0:
        raise ValueError("W must be divisible by words_per_block")
    Wg = W // words_per_block
    R = words_per_block * B            # rows handled per kernel step

    ids = x_ids.astype(jnp.int32).reshape(Wg, R, 1)
    hr = h.reshape(Wg, R, H)
    cr = c.reshape(Wg, R, H)

    table, w_top, w_bot, bias = (packed["table"], packed["w_top"],
                                 packed["w_bot"], packed["b"])
    V, E = table.shape
    Gp = w_top.shape[1]

    out = pl.pallas_call(
        wordlstm_kernel,
        out_shape=jax.ShapeDtypeStruct((Wg, R, H), jnp.float32),
        grid=(Wg,),
        in_specs=[
            # per-word-block inputs
            pl.BlockSpec((None, R, 1), lambda w: (w, 0, 0)),   # ids
            pl.BlockSpec((None, R, H), lambda w: (w, 0, 0)),   # h
            pl.BlockSpec((None, R, H), lambda w: (w, 0, 0)),   # c
            # parameters: constant block index -> loaded into VMEM once, resident
            pl.BlockSpec((V, E), lambda w: (0, 0)),            # embedding table
            pl.BlockSpec((E, Gp), lambda w: (0, 0)),           # W_top  (E,  3Hp)
            pl.BlockSpec((H, Gp), lambda w: (0, 0)),           # W_bot  (H,  3Hp)
            pl.BlockSpec((1, Gp), lambda w: (0, 0)),           # fused bias
        ],
        out_specs=pl.BlockSpec((None, R, H), lambda w: (w, 0, 0)),
        compiler_params=pltpu.CompilerParams(
            dimension_semantics=("parallel",)),                # v7x: split words across TCs
    )(ids, hr, cr, table, w_top, w_bot, bias)
    return out.reshape(W, B, H)


def word_lstm_forward(x_ids, h, c, packed):
    """Module-equivalent API: x_ids (1, B) int32, h/c (B, H) f32 -> (B, H)."""
    B = x_ids.shape[1]
    out = word_lstm_forward_words(x_ids.reshape(1, B), h[None], c[None],
                                  packed, words_per_block=1)
    return out[0]


# ---------------------------------------------------------------------------
# Params / reference
# ---------------------------------------------------------------------------
def init_params(key, word_size, embed_dim, hidden_dim):
    """Deterministic synthetic init (shapes mirror the nn.Module __init__)."""
    ks = jax.random.split(key, 9)
    in_dim = hidden_dim + embed_dim
    bound = 1.0 / jnp.sqrt(jnp.float32(in_dim))
    u = lambda k, shape: jax.random.uniform(k, shape, jnp.float32, -bound, bound)
    return {
        "word_embeds": jax.random.normal(ks[0], (word_size, embed_dim), jnp.float32),
        # stored transposed vs PyTorch: (in_features = E+H, out_features = H)
        "w_f": u(ks[1], (in_dim, hidden_dim)), "b_f": u(ks[2], (1, hidden_dim)),
        "w_i": u(ks[3], (in_dim, hidden_dim)), "b_i": u(ks[4], (1, hidden_dim)),
        "w_c": u(ks[5], (in_dim, hidden_dim)), "b_c": u(ks[6], (1, hidden_dim)),
        # w_l / b_l exist in the module but are unused in forward()
        "w_l": u(ks[7], (in_dim, hidden_dim)), "b_l": u(ks[8], (1, hidden_dim)),
    }


def reference_forward_word(ids_b, h, c, params):
    """Plain-JAX reference for one lattice word. ids_b: (B,)."""
    emb = jnp.take(params["word_embeds"], ids_b, axis=0)          # (B, E)
    z = jnp.concatenate([emb, h], axis=1)                         # (B, E+H)
    i = jax.nn.sigmoid(z @ params["w_i"] + params["b_i"])
    f = jax.nn.sigmoid(z @ params["w_f"] + params["b_f"])
    c_ = jnp.tanh(z @ params["w_c"] + params["b_c"])
    return f * c + i * c_


# ---------------------------------------------------------------------------
# Demo / correctness checks
# ---------------------------------------------------------------------------
if __name__ == "__main__":
    word_size, embed_dim, hidden_dim = 16, 32, 32
    B, W = 8, 8                               # batch, number of lattice words

    key = jax.random.PRNGKey(0)
    k_p, k_x, k_h, k_c = jax.random.split(key, 4)
    params = init_params(k_p, word_size, embed_dim, hidden_dim)

    x_ids_words = jax.random.randint(k_x, (W, B), 0, word_size, dtype=jnp.int32)
    h_words = jax.random.normal(k_h, (W, B, hidden_dim), jnp.float32)
    c_words = jax.random.normal(k_c, (W, B, hidden_dim), jnp.float32)

    ref_w = jax.vmap(reference_forward_word, in_axes=(0, 0, 0, None))(
        x_ids_words, h_words, c_words, params)

    # --- f32 path (strict module semantics), many words per pallas_call -------
    packed_f32 = pack_params(params, jnp.float32)
    out_w = word_lstm_forward_words(x_ids_words, h_words, c_words, packed_f32,
                                    words_per_block=2)
    out_w = jax.block_until_ready(out_w)
    assert out_w.shape == (W, B, hidden_dim)
    assert jnp.allclose(out_w, ref_w, atol=1e-4, rtol=1e-4)

    # --- single-word call with the module's exact signature: x (1, B) ---------
    out_1 = word_lstm_forward(x_ids_words[0:1], h_words[0], c_words[0], packed_f32)
    out_1 = jax.block_until_ready(out_1)
    assert out_1.shape == (B, hidden_dim)
    assert jnp.allclose(out_1, ref_w[0], atol=1e-4, rtol=1e-4)

    # --- bf16 MXU-operand variant (v6e/v7x), f32 accumulate + f32 gates -------
    packed_bf16 = pack_params(params, jnp.bfloat16)
    out_bf = word_lstm_forward_words(x_ids_words, h_words, c_words, packed_bf16,
                                     words_per_block=2)
    out_bf = jax.block_until_ready(out_bf)
    assert jnp.allclose(out_bf, ref_w, atol=5e-2, rtol=5e-2)

    print("KERNEL_OK")
</pallas_src>

<mosaic_0001>
module attributes {stable_mosaic.version = 11 : i64} {
  func.func @wordlstm_kernel(%arg0: i32, %arg1: memref<1x16x1xi32, #tpu.memory_space<vmem>>, %arg2: memref<1x16x32xf32, #tpu.memory_space<vmem>>, %arg3: memref<1x16x32xf32, #tpu.memory_space<vmem>>, %arg4: memref<16x32xf32, #tpu.memory_space<vmem>>, %arg5: memref<32x128xf32, #tpu.memory_space<vmem>>, %arg6: memref<32x128xf32, #tpu.memory_space<vmem>>, %arg7: memref<1x128xf32, #tpu.memory_space<vmem>>, %arg8: memref<1x16x32xf32, #tpu.memory_space<vmem>>) attributes {dimension_semantics = [#tpu.dimension_semantics<parallel>], iteration_bounds = array<i64: 4>, scalar_prefetch = 0 : i64, scratch_operands = 0 : i64, tpu.core_type = #tpu.core_type<tc>, window_params = [{transform_indices = @transform_0, window_bounds = array<i64: 1, 16, 1>}, {transform_indices = @transform_1, window_bounds = array<i64: 1, 16, 32>}, {transform_indices = @transform_2, window_bounds = array<i64: 1, 16, 32>}, {pipeline_mode = #tpu.pipeline_mode<synchronous>, transform_indices = @transform_3, window_bounds = array<i64: 16, 32>}, {pipeline_mode = #tpu.pipeline_mode<synchronous>, transform_indices = @transform_4, window_bounds = array<i64: 32, 128>}, {pipeline_mode = #tpu.pipeline_mode<synchronous>, transform_indices = @transform_5, window_bounds = array<i64: 32, 128>}, {pipeline_mode = #tpu.pipeline_mode<synchronous>, transform_indices = @transform_6, window_bounds = array<i64: 1, 128>}, {transform_indices = @transform_7, window_bounds = array<i64: 1, 16, 32>}]} {
    %c0 = arith.constant 0 : index
    %c0_0 = arith.constant 0 : index
    %c0_1 = arith.constant 0 : index
    %0 = vector.load %arg1[%c0, %c0_0, %c0_1] : memref<1x16x1xi32, #tpu.memory_space<vmem>>, vector<1x16x1xi32>
    %1 = vector.shape_cast %0 : vector<1x16x1xi32> to vector<16x1xi32>
    %2 = tpu.iota {dimensions = array<i32: 1>} : vector<16x16xi32>
    %3 = vector.broadcast %1 : vector<16x1xi32> to vector<16x16xi32>
    %4 = arith.cmpi eq, %2, %3 : vector<16x16xi32>
    %5 = arith.extui %4 : vector<16x16xi1> to vector<16x16xi32>
    %6 = arith.sitofp %5 : vector<16x16xi32> to vector<16x16xf32>
    %c0_2 = arith.constant 0 : index
    %c0_3 = arith.constant 0 : index
    %7 = vector.load %arg4[%c0_2, %c0_3] : memref<16x32xf32, #tpu.memory_space<vmem>>, vector<16x32xf32>
    %cst = arith.constant dense<0.000000e+00> : vector<16x32xf32>
    %8 = tpu.matmul %6, %7, %cst {dimension_numbers = #tpu.dot_dimension_numbers<[1], [0], [0], [1], [0, 0, 1, 1], [], []>} : vector<16x16xf32>, vector<16x32xf32>, vector<16x32xf32> -> vector<16x32xf32>
    %c0_4 = arith.constant 0 : index
    %c0_5 = arith.constant 0 : index
    %9 = vector.load %arg5[%c0_4, %c0_5] : memref<32x128xf32, #tpu.memory_space<vmem>>, vector<32x128xf32>
    %cst_6 = arith.constant dense<0.000000e+00> : vector<16x128xf32>
    %10 = tpu.matmul %8, %9, %cst_6 {dimension_numbers = #tpu.dot_dimension_numbers<[1], [0], [0], [1], [0, 0, 1, 1], [], []>} : vector<16x32xf32>, vector<32x128xf32>, vector<16x128xf32> -> vector<16x128xf32>
    %c0_7 = arith.constant 0 : index
    %c0_8 = arith.constant 0 : index
    %c0_9 = arith.constant 0 : index
    %11 = vector.load %arg2[%c0_7, %c0_8, %c0_9] : memref<1x16x32xf32, #tpu.memory_space<vmem>>, vector<1x16x32xf32>
    %12 = vector.shape_cast %11 : vector<1x16x32xf32> to vector<16x32xf32>
    %c0_10 = arith.constant 0 : index
    %c0_11 = arith.constant 0 : index
    %13 = vector.load %arg6[%c0_10, %c0_11] : memref<32x128xf32, #tpu.memory_space<vmem>>, vector<32x128xf32>
    %cst_12 = arith.constant dense<0.000000e+00> : vector<16x128xf32>
    %14 = tpu.matmul %12, %13, %cst_12 {dimension_numbers = #tpu.dot_dimension_numbers<[1], [0], [0], [1], [0, 0, 1, 1], [], []>} : vector<16x32xf32>, vector<32x128xf32>, vector<16x128xf32> -> vector<16x128xf32>
    %15 = arith.addf %10, %14 : vector<16x128xf32>
    %c0_13 = arith.constant 0 : index
    %c0_14 = arith.constant 0 : index
    %16 = vector.load %arg7[%c0_13, %c0_14] : memref<1x128xf32, #tpu.memory_space<vmem>>, vector<1x128xf32>
    %17 = vector.broadcast %16 : vector<1x128xf32> to vector<16x128xf32>
    %18 = arith.addf %15, %17 : vector<16x128xf32>
    %19 = vector.extract_strided_slice %18 {offsets = [0, 0], sizes = [16, 32], strides = [1, 1]} : vector<16x128xf32> to vector<16x32xf32>
    %20 = arith.negf %19 : vector<16x32xf32>
    %21 = math.exp %20 : vector<16x32xf32>
    %cst_15 = arith.constant 1.000000e+00 : f32
    %22 = vector.broadcast %cst_15 : f32 to vector<16x32xf32>
    %23 = arith.addf %22, %21 : vector<16x32xf32>
    %24 = arith.divf %22, %23 : vector<16x32xf32>
    %25 = vector.extract_strided_slice %18 {offsets = [0, 32], sizes = [16, 32], strides = [1, 1]} : vector<16x128xf32> to vector<16x32xf32>
    %26 = arith.negf %25 : vector<16x32xf32>
    %27 = math.exp %26 : vector<16x32xf32>
    %cst_16 = arith.constant 1.000000e+00 : f32
    %28 = vector.broadcast %cst_16 : f32 to vector<16x32xf32>
    %29 = arith.addf %28, %27 : vector<16x32xf32>
    %30 = arith.divf %28, %29 : vector<16x32xf32>
    %31 = vector.extract_strided_slice %18 {offsets = [0, 64], sizes = [16, 32], strides = [1, 1]} : vector<16x128xf32> to vector<16x32xf32>
    %32 = math.tanh %31 : vector<16x32xf32>
    %c0_17 = arith.constant 0 : index
    %c0_18 = arith.constant 0 : index
    %c0_19 = arith.constant 0 : index
    %33 = vector.load %arg3[%c0_17, %c0_18, %c0_19] : memref<1x16x32xf32, #tpu.memory_space<vmem>>, vector<1x16x32xf32>
    %34 = vector.shape_cast %33 : vector<1x16x32xf32> to vector<16x32xf32>
    %35 = arith.mulf %30, %34 : vector<16x32xf32>
    %36 = arith.mulf %24, %32 : vector<16x32xf32>
    %37 = arith.addf %35, %36 : vector<16x32xf32>
    %c0_20 = arith.constant 0 : index
    %c0_21 = arith.constant 0 : index
    %c0_22 = arith.constant 0 : index
    %38 = vector.load %arg8[%c0_20, %c0_21, %c0_22] : memref<1x16x32xf32, #tpu.memory_space<vmem>>, vector<1x16x32xf32>
    %39 = vector.shape_cast %38 : vector<1x16x32xf32> to vector<16x32xf32>
    %40 = vector.shape_cast %37 : vector<16x32xf32> to vector<1x16x32xf32>
    tpu.vector_store %arg8[%c0_20, %c0_21, %c0_22], %40 {strides = array<i32>} : memref<1x16x32xf32, #tpu.memory_space<vmem>>, vector<1x16x32xf32>,
    return
  }
  func.func @transform_0(%arg0: i32) -> (i32, i32, i32) {
    %c0_i32 = arith.constant 0 : i32
    %c0_i32_0 = arith.constant 0 : i32
    %c0_i32_1 = arith.constant 0 : i32
    return %arg0, %c0_i32, %c0_i32_0 : i32, i32, i32
  }
  func.func @transform_1(%arg0: i32) -> (i32, i32, i32) {
    %c0_i32 = arith.constant 0 : i32
    %c0_i32_0 = arith.constant 0 : i32
    %c0_i32_1 = arith.constant 0 : i32
    return %arg0, %c0_i32, %c0_i32_0 : i32, i32, i32
  }
  func.func @transform_2(%arg0: i32) -> (i32, i32, i32) {
    %c0_i32 = arith.constant 0 : i32
    %c0_i32_0 = arith.constant 0 : i32
    %c0_i32_1 = arith.constant 0 : i32
    return %arg0, %c0_i32, %c0_i32_0 : i32, i32, i32
  }
  func.func @transform_3(%arg0: i32) -> (i32, i32) {
    %c0_i32 = arith.constant 0 : i32
    %c0_i32_0 = arith.constant 0 : i32
    %c0_i32_1 = arith.constant 0 : i32
    return %c0_i32, %c0_i32_0 : i32, i32
  }
  func.func @transform_4(%arg0: i32) -> (i32, i32) {
    %c0_i32 = arith.constant 0 : i32
    %c0_i32_0 = arith.constant 0 : i32
    %c0_i32_1 = arith.constant 0 : i32
    return %c0_i32, %c0_i32_0 : i32, i32
  }
  func.func @transform_5(%arg0: i32) -> (i32, i32) {
    %c0_i32 = arith.constant 0 : i32
    %c0_i32_0 = arith.constant 0 : i32
    %c0_i32_1 = arith.constant 0 : i32
    return %c0_i32, %c0_i32_0 : i32, i32
  }
  func.func @transform_6(%arg0: i32) -> (i32, i32) {
    %c0_i32 = arith.constant 0 : i32
    %c0_i32_0 = arith.constant 0 : i32
    %c0_i32_1 = arith.constant 0 : i32
    return %c0_i32, %c0_i32_0 : i32, i32
  }
  func.func @transform_7(%arg0: i32) -> (i32, i32, i32) {
    %c0_i32 = arith.constant 0 : i32
    %c0_i32_0 = arith.constant 0 : i32
    %c0_i32_1 = arith.constant 0 : i32
    return %arg0, %c0_i32, %c0_i32_0 : i32, i32, i32
  }
}

</mosaic_0001>

<llo_original>
// kernel: tpu_custom_call.1
$region0: #{tpu_custom_call.1}
  #allocation0 [shape = 'u32[]', space=smem, size = 0x4, offset = 0x4, fixed_abs, tag = 'smem constant byte address 0x4 - core index']
  #allocation1 [shape = 'u32[144,128]{1,0:T(1,128)}', space=vmem, size = 0x12000, scoped, tag = 'internal scratch']
  %s0 = inlined_call_operand.vmem [shape: s32[4,16,1], index: 0, kind: input, shape index: {}]
  %s1 = inlined_call_operand.vmem [shape: f32[4,16,32], index: 1, kind: input, shape index: {}]
  %s2 = inlined_call_operand.hbm [shape: f32[4,16,32], index: 2, kind: input, shape index: {}]
  %s3 = inlined_call_operand.hbm [shape: f32[16,32], index: 3, kind: input, shape index: {}]
  %s4 = inlined_call_operand.hbm [shape: f32[32,128], index: 4, kind: input, shape index: {}]
  %s5 = inlined_call_operand.hbm [shape: f32[32,128], index: 5, kind: input, shape index: {}]
  %s6 = inlined_call_operand.vmem [shape: f32[1,128], index: 6, kind: input, shape index: {}]
  %s7 = inlined_call_operand.hbm [shape: f32[4,16,32], index: 7, kind: output, shape index: {}]
  %s8 = sld [smem:[#allocation0]]
  $region77: #{tpu_custom_call.1} parent=0
    _
  %s10 = ssub.s32 1, %s8
  %s11 = scalar_select 0, %s10, %s8
  $region1: #{tpu_custom_call.1} parent=0
    #allocation2 [shape = 'u8[16384]{0}', space=vmem, size = 0x4000, scoped, tag = 'input window, operand 2']
    #allocation3 [shape = 's32[2]{0}', space=sflag, size = 0x8, scoped, tag = 'scoped memory for tpu_custom_call.1']
    #allocation4 [shape = 's32[2]{0}', space=sflag, size = 0x8, scoped, tag = 'scoped memory for tpu_custom_call.1']
    #allocation5 [shape = 'u8[8192]{0}', space=vmem, size = 0x2000, scoped, tag = 'input window, operand 3, single buffered']
    #allocation6 [shape = 's32[1]{0}', space=sflag, size = 0x4, scoped, tag = 'scoped memory for tpu_custom_call.1']
    #allocation7 [shape = 'u8[16384]{0}', space=vmem, size = 0x4000, scoped, tag = 'input window, operand 4, single buffered']
    #allocation8 [shape = 'u8[16384]{0}', space=vmem, size = 0x4000, scoped, tag = 'input window, operand 5, single buffered']
    #allocation9 [shape = 's32[1]{0}', space=sflag, size = 0x4, scoped, tag = 'scoped memory for tpu_custom_call.1']
    #allocation10 [shape = 'u8[16384]{0}', space=vmem, size = 0x4000, scoped, tag = 'output window, operand 0']
    %12 = vsyncpa [#allocation3], 0
    %s13 = scalar_lea.sflag [#allocation3], 1
    %14 = vsyncpa %s13, 0
    %15 = vsyncpa [#allocation6], 0
    %16 = vsyncpa [#allocation9], 0
    %17 = vsyncpa [#allocation4], 0
    %s18 = scalar_lea.sflag [#allocation4], 1
    %19 = vsyncpa %s18, 0
    loop: start=0, step=1, limit=6
    $region2: #{tpu_custom_call.1} parent=1 // loop_pre_header
      _
    $region3: #{tpu_custom_call.1} parent=1 // loop_header
      %s21 = sphi 0, %s25
      %p22 = scmp.ge.s32.totalorder %s21, 6
      %s31 = sphi 0, %s33
      %s34 = sphi 0, %s31
      %s35 = sphi 0, %s34
      %s51 = sphi 0, %s35
      %s57 = sphi 0, %s59
      %s60 = sphi 0, %s57
      %s61 = sphi 0, %s60
      %s77 = sphi 0, %s61
      %s83 = sphi 0, %s85
      %s86 = sphi 0, %s83
      %s87 = sphi 0, %s86
      %s103 = sphi 0, %s87
      %s107 = sphi 0, %s107
      %s109 = sphi 0, %s107
      %s110 = sphi 0, %s109
      %s124 = sphi 0, %s110
      %s128 = sphi 0, %s128
      %s130 = sphi 0, %s128
      %s131 = sphi 0, %s130
      %s145 = sphi 0, %s131
      %s149 = sphi 0, %s149
      %s151 = sphi 0, %s149
      %s152 = sphi 0, %s151
      %s166 = sphi 0, %s152
      %s170 = sphi 0, %s170
      %s172 = sphi 0, %s170
      %s173 = sphi 0, %s172
      %s187 = sphi 0, %s173
      %s193 = sphi 0, %s195
      %s196 = sphi 0, %s193
      %s197 = sphi 0, %s196
      %s213 = sphi 0, %s197
    $region4: #{tpu_custom_call.1} parent=1 // loop_header_branch
      %24 = sbr.rel (%p22) target = $region8
    $region5: #{tpu_custom_call.1} parent=1 // loop_body
      %s26 = ssub.s32 %s21, 1
      %s27 = ssub.s32 %s21, 2
      %s28 = sadd.s32 %s21, 1
      %s29 = ssub.s32 %s21, %s28
      %p30 = scmp.eq.s32.totalorder %s29, 0
      %s32 = sadd.s32 %s31, 1
      %s33 = scalar_select %p30, %s31, %s32
      %p36 = pneg %p30
      %p37 = scmp.eq.s32.totalorder %s21, 3
      %p38 = por %p36, %p37
      %p39 = scmp.ne.s32.totalorder %s31, %s34
      %p40 = scmp.eq.s32.totalorder %s21, 0
      %p41 = por %p39, %p40
      %p42 = scmp.ne.s32.totalorder %s31, %s34
      %p43 = scmp.eq.s32.totalorder %s26, 3
      %p44 = por %p42, %p43
      %p45 = scmp.ne.s32.totalorder %s34, %s35
      %p46 = scmp.eq.s32.totalorder %s26, 0
      %p47 = por %p45, %p46
      %p48 = scmp.ne.s32.totalorder %s34, %s35
      %p49 = scmp.eq.s32.totalorder %s27, 3
      %p50 = por %p48, %p49
      %p52 = scmp.ne.s32.totalorder %s35, %s51
      %p53 = scmp.eq.s32.totalorder %s27, 0
      %p54 = por %p52, %p53
      %s55 = ssub.s32 %s21, %s28
      %p56 = scmp.eq.s32.totalorder %s55, 0
      %s58 = sadd.s32 %s57, 1
      %s59 = scalar_select %p56, %s57, %s58
      %p62 = pneg %p56
      %p63 = scmp.eq.s32.totalorder %s21, 3
      %p64 = por %p62, %p63
      %p65 = scmp.ne.s32.totalorder %s57, %s60
      %p66 = scmp.eq.s32.totalorder %s21, 0
      %p67 = por %p65, %p66
      %p68 = scmp.ne.s32.totalorder %s57, %s60
      %p69 = scmp.eq.s32.totalorder %s26, 3
      %p70 = por %p68, %p69
      %p71 = scmp.ne.s32.totalorder %s60, %s61
      %p72 = scmp.eq.s32.totalorder %s26, 0
      %p73 = por %p71, %p72
      %p74 = scmp.ne.s32.totalorder %s60, %s61
      %p75 = scmp.eq.s32.totalorder %s27, 3
      %p76 = por %p74, %p75
      %p78 = scmp.ne.s32.totalorder %s61, %s77
      %p79 = scmp.eq.s32.totalorder %s27, 0
      %p80 = por %p78, %p79
      %s81 = ssub.s32 %s21, %s28
      %p82 = scmp.eq.s32.totalorder %s81, 0
      %s84 = sadd.s32 %s83, 1
      %s85 = scalar_select %p82, %s83, %s84
      %p88 = pneg %p82
      %p89 = scmp.eq.s32.totalorder %s21, 3
      %p90 = por %p88, %p89
      %p91 = scmp.ne.s32.totalorder %s83, %s86
      %p92 = scmp.eq.s32.totalorder %s21, 0
      %p93 = por %p91, %p92
      %p94 = scmp.ne.s32.totalorder %s83, %s86
      %p95 = scmp.eq.s32.totalorder %s26, 3
      %p96 = por %p94, %p95
      %p97 = scmp.ne.s32.totalorder %s86, %s87
      %p98 = scmp.eq.s32.totalorder %s26, 0
      %p99 = por %p97, %p98
      %p100 = scmp.ne.s32.totalorder %s86, %s87
      %p101 = scmp.eq.s32.totalorder %s27, 3
      %p102 = por %p100, %p101
      %p104 = scmp.ne.s32.totalorder %s87, %s103
      %p105 = scmp.eq.s32.totalorder %s27, 0
      %p106 = por %p104, %p105
      %s108 = sadd.s32 %s107, 1
      %p111 = scmp.eq.s32.totalorder %s21, 3
      %p112 = scmp.ne.s32.totalorder %s107, %s109
      %p113 = scmp.eq.s32.totalorder %s21, 0
      %p114 = por %p112, %p113
      %p115 = scmp.ne.s32.totalorder %s107, %s109
      %p116 = scmp.eq.s32.totalorder %s26, 3
      %p117 = por %p115, %p116
      %p118 = scmp.ne.s32.totalorder %s109, %s110
      %p119 = scmp.eq.s32.totalorder %s26, 0
      %p120 = por %p118, %p119
      %p121 = scmp.ne.s32.totalorder %s109, %s110
      %p122 = scmp.eq.s32.totalorder %s27, 3
      %p123 = por %p121, %p122
      %p125 = scmp.ne.s32.totalorder %s110, %s124
      %p126 = scmp.eq.s32.totalorder %s27, 0
      %p127 = por %p125, %p126
      %s129 = sadd.s32 %s128, 1
      %p132 = scmp.eq.s32.totalorder %s21, 3
      %p133 = scmp.ne.s32.totalorder %s128, %s130
      %p134 = scmp.eq.s32.totalorder %s21, 0
      %p135 = por %p133, %p134
      %p136 = scmp.ne.s32.totalorder %s128, %s130
      %p137 = scmp.eq.s32.totalorder %s26, 3
      %p138 = por %p136, %p137
      %p139 = scmp.ne.s32.totalorder %s130, %s131
      %p140 = scmp.eq.s32.totalorder %s26, 0
      %p141 = por %p139, %p140
      %p142 = scmp.ne.s32.totalorder %s130, %s131
      %p143 = scmp.eq.s32.totalorder %s27, 3
      %p144 = por %p142, %p143
      %p146 = scmp.ne.s32.totalorder %s131, %s145
      %p147 = scmp.eq.s32.totalorder %s27, 0
      %p148 = por %p146, %p147
      %s150 = sadd.s32 %s149, 1
      %p153 = scmp.eq.s32.totalorder %s21, 3
      %p154 = scmp.ne.s32.totalorder %s149, %s151
      %p155 = scmp.eq.s32.totalorder %s21, 0
      %p156 = por %p154, %p155
      %p157 = scmp.ne.s32.totalorder %s149, %s151
      %p158 = scmp.eq.s32.totalorder %s26, 3
      %p159 = por %p157, %p158
      %p160 = scmp.ne.s32.totalorder %s151, %s152
      %p161 = scmp.eq.s32.totalorder %s26, 0
      %p162 = por %p160, %p161
      %p163 = scmp.ne.s32.totalorder %s151, %s152
      %p164 = scmp.eq.s32.totalorder %s27, 3
      %p165 = por %p163, %p164
      %p167 = scmp.ne.s32.totalorder %s152, %s166
      %p168 = scmp.eq.s32.totalorder %s27, 0
      %p169 = por %p167, %p168
      %s171 = sadd.s32 %s170, 1
      %p174 = scmp.eq.s32.totalorder %s21, 3
      %p175 = scmp.ne.s32.totalorder %s170, %s172
      %p176 = scmp.eq.s32.totalorder %s21, 0
      %p177 = por %p175, %p176
      %p178 = scmp.ne.s32.totalorder %s170, %s172
      %p179 = scmp.eq.s32.totalorder %s26, 3
      %p180 = por %p178, %p179
      %p181 = scmp.ne.s32.totalorder %s172, %s173
      %p182 = scmp.eq.s32.totalorder %s26, 0
      %p183 = por %p181, %p182
      %p184 = scmp.ne.s32.totalorder %s172, %s173
      %p185 = scmp.eq.s32.totalorder %s27, 3
      %p186 = por %p184, %p185
      %p188 = scmp.ne.s32.totalorder %s173, %s187
      %p189 = scmp.eq.s32.totalorder %s27, 0
      %p190 = por %p188, %p189
      %s191 = ssub.s32 %s21, %s28
      %p192 = scmp.eq.s32.totalorder %s191, 0
      %s194 = sadd.s32 %s193, 1
      %s195 = scalar_select %p192, %s193, %s194
      %p198 = pneg %p192
      %p199 = scmp.eq.s32.totalorder %s21, 3
      %p200 = por %p198, %p199
      %p201 = scmp.ne.s32.totalorder %s193, %s196
      %p202 = scmp.eq.s32.totalorder %s21, 0
      %p203 = por %p201, %p202
      %p204 = scmp.ne.s32.totalorder %s193, %s196
      %p205 = scmp.eq.s32.totalorder %s26, 3
      %p206 = por %p204, %p205
      %p207 = scmp.ne.s32.totalorder %s196, %s197
      %p208 = scmp.eq.s32.totalorder %s26, 0
      %p209 = por %p207, %p208
      %p210 = scmp.ne.s32.totalorder %s196, %s197
      %p211 = scmp.eq.s32.totalorder %s27, 3
      %p212 = por %p210, %p211
      %p214 = scmp.ne.s32.totalorder %s197, %s213
      %p215 = scmp.eq.s32.totalorder %s27, 0
      %p216 = por %p214, %p215
      %p217 = scmp.le.s32.totalorder 1, %s21
      %p218 = scmp.lt.s32.totalorder %s21, 5
      %p219 = pnand %p217, %p218
      %p220 = pneg %p219
      // Predicated region
      $region9: #{tpu_custom_call.1} parent=5 // pred_check
        _
      $region10: #{tpu_custom_call.1} parent=5 // pred_check_branch
        %222 = sbr.rel (%p219) target = $region12
      $region11: #{tpu_custom_call.1} parent=5 // pred_region
        %s223 = ssub.s32 %s21, 1
        // Predicated region
        $region13: #{tpu_custom_call.1} parent=11 // pred_check
          %p224 = pneg %p120
        $region14: #{tpu_custom_call.1} parent=11 // pred_check_branch
          %226 = sbr.rel (%p224) target = $region16
        $region15: #{tpu_custom_call.1} parent=11 // pred_region
          %s228 = ssub.s32 256, 256
          %229 = vsyncadd [#allocation6], %s228
          %s230 = sshll.u32 [#allocation5], 4
          %s231 = int_to_ptr.vmem [resolvable:$true] %s230
          %236 = dma.hbm_to_vmem [thread:$0]  %s3, 256, %s231, [#allocation6], 128, 128, 8
        $region16: #{tpu_custom_call.1} parent=11 // pred_fallthru
          _
        // Predicated region
        $region17: #{tpu_custom_call.1} parent=11 // pred_check
          %p237 = pneg %p141
        $region18: #{tpu_custom_call.1} parent=11 // pred_check_branch
          %239 = sbr.rel (%p237) target = $region20
        $region19: #{tpu_custom_call.1} parent=11 // pred_region
          %s241 = ssub.s32 512, 512
          %242 = vsyncadd [#allocation6], %s241
          %s243 = sshll.u32 [#allocation7], 4
          %s244 = int_to_ptr.vmem [resolvable:$true] %s243
          %249 = dma.hbm_to_vmem [thread:$0]  %s4, 512, %s244, [#allocation6], 128, 128, 8
        $region20: #{tpu_custom_call.1} parent=11 // pred_fallthru
          _
        // Predicated region
        $region21: #{tpu_custom_call.1} parent=11 // pred_check
          %p250 = pneg %p162
        $region22: #{tpu_custom_call.1} parent=11 // pred_check_branch
          %252 = sbr.rel (%p250) target = $region24
        $region23: #{tpu_custom_call.1} parent=11 // pred_region
          %s254 = ssub.s32 512, 512
          %255 = vsyncadd [#allocation9], %s254
          %s256 = sshll.u32 [#allocation8], 4
          %s257 = int_to_ptr.vmem [resolvable:$true] %s256
          %262 = dma.hbm_to_vmem [thread:$0]  %s5, 512, %s257, [#allocation9], 128, 128, 8
        $region24: #{tpu_custom_call.1} parent=11 // pred_fallthru
          _
        // Predicated region
        $region25: #{tpu_custom_call.1} parent=11 // pred_check
          %p263 = pneg %p183
        $region26: #{tpu_custom_call.1} parent=11 // pred_check_branch
          %265 = sbr.rel (%p263) target = $region28
        $region27: #{tpu_custom_call.1} parent=11 // pred_region
          _
        $region28: #{tpu_custom_call.1} parent=11 // pred_fallthru
          _
      $region12: #{tpu_custom_call.1} parent=5 // pred_fallthru
        _
      %p266 = scmp.lt.s32.totalorder %s21, 4
      // Predicated region
      $region29: #{tpu_custom_call.1} parent=5 // pred_check
        %p267 = pneg %p266
      $region30: #{tpu_custom_call.1} parent=5 // pred_check_branch
        %269 = sbr.rel (%p267) target = $region32
      $region31: #{tpu_custom_call.1} parent=5 // pred_region
        // Predicated region
        $region33: #{tpu_custom_call.1} parent=31 // pred_check
          %p270 = pneg %p41
        $region34: #{tpu_custom_call.1} parent=31 // pred_check_branch
          %272 = sbr.rel (%p270) target = $region36
        $region35: #{tpu_custom_call.1} parent=31 // pred_region
          %p273 = scmp.lt.s32.totalorder %s21, 3
          %s274 = scalar_select %p273, %s21, 3
          %s275 = smul.addr %s274, 2
          %s276 = smul.addr %s275, 8
          %s277 = scalar_lea.vmem %s0, %s276
        $region36: #{tpu_custom_call.1} parent=31 // pred_fallthru
          _
        // Predicated region
        $region37: #{tpu_custom_call.1} parent=31 // pred_check
          %p278 = pneg %p67
        $region38: #{tpu_custom_call.1} parent=31 // pred_check_branch
          %280 = sbr.rel (%p278) target = $region40
        $region39: #{tpu_custom_call.1} parent=31 // pred_region
          %p281 = scmp.lt.s32.totalorder %s21, 3
          %s282 = scalar_select %p281, %s21, 3
          %s283 = smul.addr %s282, 2
          %s284 = smul.addr %s283, 8
          %s285 = scalar_lea.vmem %s1, %s284
        $region40: #{tpu_custom_call.1} parent=31 // pred_fallthru
          _
        // Predicated region
        $region41: #{tpu_custom_call.1} parent=31 // pred_check
          %p286 = pneg %p93
        $region42: #{tpu_custom_call.1} parent=31 // pred_check_branch
          %288 = sbr.rel (%p286) target = $region44
        $region43: #{tpu_custom_call.1} parent=31 // pred_region
          %s289 = sand.u32 %s83, 1
          %s290 = scalar_lea.sflag [#allocation3], %s289
          %s291 = sand.u32 %s83, 1
          %s292 = smul.addr %s291, 16
          %s293 = scalar_lea.vmem [#allocation2], %s292
          %s295 = ssub.s32 256, 256
          %296 = vsyncadd %s290, %s295
          %s297 = smul.addr %s21, 2
          %s298 = smul.addr %s297, 128
          %s299 = scalar_lea.hbm %s2, %s298
          %s300 = sshll.u32 %s293, 4
          %s301 = int_to_ptr.vmem [resolvable:$true] %s300
          %306 = dma.hbm_to_vmem [thread:$0]  %s299, 256, %s301, %s290, 128, 128, 8
        $region44: #{tpu_custom_call.1} parent=31 // pred_fallthru
          _
      $region32: #{tpu_custom_call.1} parent=5 // pred_fallthru
        _
      %p307 = scmp.le.s32.totalorder 1, %s21
      %p308 = scmp.lt.s32.totalorder %s21, 5
      %p309 = pnand %p307, %p308
      %p310 = pneg %p309
      // Predicated region
      $region45: #{tpu_custom_call.1} parent=5 // pred_check
        _
      $region46: #{tpu_custom_call.1} parent=5 // pred_check_branch
        %312 = sbr.rel (%p309) target = $region48
      $region47: #{tpu_custom_call.1} parent=5 // pred_region
        %s313 = ssub.s32 %s21, 1
        %s314 = sand.u32 %s86, 1
        %s315 = scalar_lea.sflag [#allocation3], %s314
        %s316 = sand.u32 %s86, 1
        %s317 = smul.addr %s316, 16
        %s318 = scalar_lea.vmem [#allocation2], %s317
        // Predicated region
        $region49: #{tpu_custom_call.1} parent=47 // pred_check
          %p319 = pneg %p99
        $region50: #{tpu_custom_call.1} parent=47 // pred_check_branch
          %321 = sbr.rel (%p319) target = $region52
        $region51: #{tpu_custom_call.1} parent=47 // pred_region
          %322 = dma.done %s315, 256
        $region52: #{tpu_custom_call.1} parent=47 // pred_fallthru
          _
        // Predicated region
        $region53: #{tpu_custom_call.1} parent=47 // pred_check
          %p323 = pneg %p120
        $region54: #{tpu_custom_call.1} parent=47 // pred_check_branch
          %325 = sbr.rel (%p323) target = $region56
        $region55: #{tpu_custom_call.1} parent=47 // pred_region
          %326 = dma.done [#allocation6], 256
        $region56: #{tpu_custom_call.1} parent=47 // pred_fallthru
          _
        // Predicated region
        $region57: #{tpu_custom_call.1} parent=47 // pred_check
          %p327 = pneg %p141
        $region58: #{tpu_custom_call.1} parent=47 // pred_check_branch
          %329 = sbr.rel (%p327) target = $region60
        $region59: #{tpu_custom_call.1} parent=47 // pred_region
          %330 = dma.done [#allocation6], 512
        $region60: #{tpu_custom_call.1} parent=47 // pred_fallthru
          _
        // Predicated region
        $region61: #{tpu_custom_call.1} parent=47 // pred_check
          %p331 = pneg %p162
        $region62: #{tpu_custom_call.1} parent=47 // pred_check_branch
          %333 = sbr.rel (%p331) target = $region64
        $region63: #{tpu_custom_call.1} parent=47 // pred_region
          %334 = dma.done [#allocation9], 512
        $region64: #{tpu_custom_call.1} parent=47 // pred_fallthru
          _
        %p335 = scmp.lt.s32.totalorder %s26, 3
        %s336 = scalar_select %p335, %s26, 3
        %s337 = smul.addr %s336, 2
        %s338 = smul.addr %s337, 8
        %s339 = scalar_lea.vmem %s0, %s338
        %p340 = pneg %p47
        %p341 = pneg %p44
        %p342 = scmp.lt.s32.totalorder %s26, 3
        %s343 = scalar_select %p342, %s26, 3
        %s344 = smul.addr %s343, 2
        %s345 = smul.addr %s344, 8
        %s346 = scalar_lea.vmem %s1, %s345
        %p347 = pneg %p73
        %p348 = pneg %p70
        %s349 = sand.u32 %s86, 1
        %s350 = scalar_lea.sflag [#allocation3], %s349
        %s351 = sand.u32 %s86, 1
        %s352 = smul.addr %s351, 16
        %s353 = scalar_lea.vmem [#allocation2], %s352
        %p354 = pneg %p99
        %p355 = pneg %p96
        %p356 = pneg %p120
        %p357 = pneg %p117
        %p358 = pneg %p141
        %p359 = pneg %p138
        %p360 = pneg %p162
        %p361 = pneg %p159
        %p362 = pneg %p183
        %p363 = pneg %p180
        %p364 = pneg %p209
        %p365 = pneg %p206
        %s366 = sand.u32 %s196, 1
        %s367 = scalar_lea.sflag [#allocation4], %s366
        %s368 = sand.u32 %s196, 1
        %s369 = smul.addr %s368, 16
        %s370 = scalar_lea.vmem [#allocation10], %s369
        %p371 = scmp.lt.s32.totalorder %s26, 3
        %s372 = scalar_select %p371, %s26, 3
        %s373 = smul.addr %s372, 2
        %s374 = smul.addr %s373, 8
        %s375 = scalar_lea.vmem %s0, %s374
        %p376 = scmp.lt.s32.totalorder %s26, 3
        %s377 = scalar_select %p376, %s26, 3
        %s378 = smul.addr %s377, 2
        %s379 = smul.addr %s378, 8
        %s380 = scalar_lea.vmem %s1, %s379
        %v381 = vld [vmem:[%s375] sm:$0xff]
        %v382 = vld [vmem:[%s375 + $0x8] sm:$0xff]
        %v383 = vlaneseq
        %v384 = vand.u32 %v383, 127
        %385 = vset.pattern.permute.xlu0 0
        %386 = vperm.xlu0 %385, %v381
        %v387 = vpop.permute.xlu0 %386
        %388 = vset.pattern.permute.xlu0 0
        %389 = vperm.xlu0 %388, %v382
        %v390 = vpop.permute.xlu0 %389
        %vm391 = vcmp.eq.s32.totalorder %v384, %v387
        %vm392 = vcmp.eq.s32.totalorder %v384, %v390
        %v393 = vsel %vm391, 1, 0
        %v394 = vsel %vm392, 1, 0
        %v395 = vcvt.s32.f32 %v393
        %v396 = vcvt.s32.f32 %v394
        %v397 = vld [vmem:[#allocation5] sm:$0xff]
        %v398 = vld [vmem:[#allocation5 + $0x8] sm:$0xff]
        %vm399 = vcmask 130048
        %v401 = vsel %vm399, %v395, 0
        %v404 = vsel %vm399, %v396, 0
        %406 = vmatprep.subr.mxu0 0.0
        %407 = vmatpush1.msra.mxu0 %v397
        %408 = vmatprep.subr.mxu0 0.0
        %409 = vmatpush1.msra.mxu0 %v398
        %410 = vmatprep.subr.mxu0 0.0
        %411 = vmatpush1.msra.mxu0 0.0
        %412 = vmatprep.subr.mxu0 0.0
        %413 = vmatpush1.msra.mxu0 0.0
        %414 = vmatprep.subr.mxu0 0.0
        %415 = vmatpush1.msra.mxu0 0.0
        %416 = vmatprep.subr.mxu0 0.0
        %417 = vmatpush1.msra.mxu0 0.0
        %418 = vmatprep.subr.mxu0 0.0
        %419 = vmatpush1.msra.mxu0 0.0
        %420 = vmatprep.subr.mxu0 0.0
        %421 = vmatpush1.msra.mxu0 0.0
        %422 = vmatprep.subr.mxu0 0.0
        %423 = vmatpush1.msra.mxu0 0.0
        %424 = vmatprep.subr.mxu0 0.0
        %425 = vmatpush1.msra.mxu0 0.0
        %426 = vmatprep.subr.mxu0 0.0
        %427 = vmatpush1.msra.mxu0 0.0
        %428 = vmatprep.subr.mxu0 0.0
        %429 = vmatpush1.msra.mxu0 0.0
        %430 = vmatprep.subr.mxu0 0.0
        %431 = vmatpush1.msra.mxu0 0.0
        %432 = vmatprep.subr.mxu0 0.0
        %433 = vmatpush1.msra.mxu0 0.0
        %434 = vmatprep.subr.mxu0 0.0
        %435 = vmatpush1.msra.mxu0 0.0
        %436 = vmatprep.subr.mxu0 0.0
        %437 = vmatpush1.msra.mxu0 0.0
        %438 = vmatprep.subr.mxu0 0.0
        %439 = vmatpush1.msra.mxu0 0.0
        %440 = vmatprep.subr.mxu0 0.0
        %441 = vmatpush1.msra.mxu0 0.0
        %442 = vmatprep.subr.mxu0 0.0
        %443 = vmatpush1.msra.mxu0 0.0
        %444 = vmatprep.subr.mxu0 0.0
        %445 = vmatpush1.msra.mxu0 0.0
        %446 = vmatprep.subr.mxu0 0.0
        %447 = vmatpush1.msra.mxu0 0.0
        %448 = vmatprep.subr.mxu0 0.0
        %449 = vmatpush1.msra.mxu0 0.0
        %450 = vmatprep.subr.mxu0 0.0
        %451 = vmatpush1.msra.mxu0 0.0
        %452 = vmatprep.subr.mxu0 0.0
        %453 = vmatpush1.msra.mxu0 0.0
        %454 = vmatprep.subr.mxu0 0.0
        %455 = vmatpush1.msra.mxu0 0.0
        %456 = vmatprep.subr.mxu0 0.0
        %457 = vmatpush1.msra.mxu0 0.0
        %458 = vmatprep.subr.mxu0 0.0
        %459 = vmatpush1.msra.mxu0 0.0
        %460 = vmatprep.subr.mxu0 0.0
        %461 = vmatpush1.msra.mxu0 0.0
        %462 = vmatprep.subr.mxu0 0.0
        %463 = vmatpush1.msra.mxu0 0.0
        %464 = vmatprep.subr.mxu0 0.0
        %465 = vmatpush1.msra.mxu0 0.0
        %466 = vmatprep.subr.mxu0 0.0
        %467 = vmatpush1.msra.mxu0 0.0
        %468 = vmatprep.subr.mxu0 0.0
        %469 = vmatpush1.msra.mxu0 0.0
        %470 = vmatprep.mubr.f32.mxu0 0.0
        %471 = vmatmul.mubr.f32.gmra.mrb[0].mxu0 %v401
        %v472 = vpop.f32.mrb[0].mxu0
        %v473 = vadd.f32 0.0, %v472
        %v474 = vpop.f32.mrb[0].mxu0
        %475 = vmatprep.mubr.f32.mxu0 0.0
        %476 = vmatmul.mubr.f32.gmra.mrb[0].mxu0 %v404
        %v477 = vpop.f32.mrb[0].mxu0
        %v478 = vadd.f32 0.0, %v477
        %v479 = vpop.f32.mrb[0].mxu0
        %480 = vdwg.mxu0
        %v481 = vld [vmem:[#allocation7] sm:$0xff]
        %v482 = vld [vmem:[#allocation7 + $0x8] sm:$0xff]
        %v483 = vld [vmem:[#allocation7 + $0x10] sm:$0xff]
        %v484 = vld [vmem:[#allocation7 + $0x18] sm:$0xff]
        %v485 = vld [vmem:[%s380] sm:$0xff]
        %v486 = vld [vmem:[%s380 + $0x8] sm:$0xff]
        %v487 = vld [vmem:[#allocation8] sm:$0xff]
        %v488 = vld [vmem:[#allocation8 + $0x8] sm:$0xff]
        %v489 = vld [vmem:[#allocation8 + $0x10] sm:$0xff]
        %v490 = vld [vmem:[#allocation8 + $0x18] sm:$0xff]
        %vm491 = vcmask 261120
        %v493 = vsel %vm491, %v485, 0
        %v496 = vsel %vm491, %v486, 0
        %498 = vmatprep.subr.mxu0 0.0
        %499 = vmatpush1.msra.mxu0 %v487
        %500 = vmatprep.subr.mxu0 0.0
        %501 = vmatpush1.msra.mxu0 %v488
        %502 = vmatprep.subr.mxu0 0.0
        %503 = vmatpush1.msra.mxu0 %v489
        %504 = vmatprep.subr.mxu0 0.0
        %505 = vmatpush1.msra.mxu0 %v490
        %506 = vmatprep.subr.mxu0 0.0
        %507 = vmatpush1.msra.mxu0 0.0
        %508 = vmatprep.subr.mxu0 0.0
        %509 = vmatpush1.msra.mxu0 0.0
        %510 = vmatprep.subr.mxu0 0.0
        %511 = vmatpush1.msra.mxu0 0.0
        %512 = vmatprep.subr.mxu0 0.0
        %513 = vmatpush1.msra.mxu0 0.0
        %514 = vmatprep.subr.mxu0 0.0
        %515 = vmatpush1.msra.mxu0 0.0
        %516 = vmatprep.subr.mxu0 0.0
        %517 = vmatpush1.msra.mxu0 0.0
        %518 = vmatprep.subr.mxu0 0.0
        %519 = vmatpush1.msra.mxu0 0.0
        %520 = vmatprep.subr.mxu0 0.0
        %521 = vmatpush1.msra.mxu0 0.0
        %522 = vmatprep.subr.mxu0 0.0
        %523 = vmatpush1.msra.mxu0 0.0
        %524 = vmatprep.subr.mxu0 0.0
        %525 = vmatpush1.msra.mxu0 0.0
        %526 = vmatprep.subr.mxu0 0.0
        %527 = vmatpush1.msra.mxu0 0.0
        %528 = vmatprep.subr.mxu0 0.0
        %529 = vmatpush1.msra.mxu0 0.0
        %530 = vmatprep.subr.mxu0 0.0
        %531 = vmatpush1.msra.mxu0 0.0
        %532 = vmatprep.subr.mxu0 0.0
        %533 = vmatpush1.msra.mxu0 0.0
        %534 = vmatprep.subr.mxu0 0.0
        %535 = vmatpush1.msra.mxu0 0.0
        %536 = vmatprep.subr.mxu0 0.0
        %537 = vmatpush1.msra.mxu0 0.0
        %538 = vmatprep.subr.mxu0 0.0
        %539 = vmatpush1.msra.mxu0 0.0
        %540 = vmatprep.subr.mxu0 0.0
        %541 = vmatpush1.msra.mxu0 0.0
        %542 = vmatprep.subr.mxu0 0.0
        %543 = vmatpush1.msra.mxu0 0.0
        %544 = vmatprep.subr.mxu0 0.0
        %545 = vmatpush1.msra.mxu0 0.0
        %546 = vmatprep.subr.mxu0 0.0
        %547 = vmatpush1.msra.mxu0 0.0
        %548 = vmatprep.subr.mxu0 0.0
        %549 = vmatpush1.msra.mxu0 0.0
        %550 = vmatprep.subr.mxu0 0.0
        %551 = vmatpush1.msra.mxu0 0.0
        %552 = vmatprep.subr.mxu0 0.0
        %553 = vmatpush1.msra.mxu0 0.0
        %554 = vmatprep.subr.mxu0 0.0
        %555 = vmatpush1.msra.mxu0 0.0
        %556 = vmatprep.subr.mxu0 0.0
        %557 = vmatpush1.msra.mxu0 0.0
        %558 = vmatprep.subr.mxu0 0.0
        %559 = vmatpush1.msra.mxu0 0.0
        %560 = vmatprep.subr.mxu0 0.0
        %561 = vmatpush1.msra.mxu0 0.0
        %562 = vmatprep.mubr.f32.mxu0 0.0
        %563 = vmatmul.mubr.f32.gmra.mrb[0].mxu0 %v493
        %v564 = vpop.f32.mrb[0].mxu0
        %v565 = vadd.f32 0.0, %v564
        %v566 = vpop.f32.mrb[0].mxu0
        %567 = vmatprep.mubr.f32.mxu0 0.0
        %568 = vmatmul.mubr.f32.gmra.mrb[0].mxu0 %v496
        %v569 = vpop.f32.mrb[0].mxu0
        %v570 = vadd.f32 0.0, %v569
        %v571 = vpop.f32.mrb[0].mxu0
        %572 = vdwg.mxu0
        %v574 = vsel %vm491, %v473, 0
        %v577 = vsel %vm491, %v478, 0
        %579 = vmatprep.subr.mxu0 0.0
        %580 = vmatpush1.msra.mxu0 %v481
        %581 = vmatprep.subr.mxu0 0.0
        %582 = vmatpush1.msra.mxu0 %v482
        %583 = vmatprep.subr.mxu0 0.0
        %584 = vmatpush1.msra.mxu0 %v483
        %585 = vmatprep.subr.mxu0 0.0
        %586 = vmatpush1.msra.mxu0 %v484
        %587 = vmatprep.subr.mxu0 0.0
        %588 = vmatpush1.msra.mxu0 0.0
        %589 = vmatprep.subr.mxu0 0.0
        %590 = vmatpush1.msra.mxu0 0.0
        %591 = vmatprep.subr.mxu0 0.0
        %592 = vmatpush1.msra.mxu0 0.0
        %593 = vmatprep.subr.mxu0 0.0
        %594 = vmatpush1.msra.mxu0 0.0
        %595 = vmatprep.subr.mxu0 0.0
        %596 = vmatpush1.msra.mxu0 0.0
        %597 = vmatprep.subr.mxu0 0.0
        %598 = vmatpush1.msra.mxu0 0.0
        %599 = vmatprep.subr.mxu0 0.0
        %600 = vmatpush1.msra.mxu0 0.0
        %601 = vmatprep.subr.mxu0 0.0
        %602 = vmatpush1.msra.mxu0 0.0
        %603 = vmatprep.subr.mxu0 0.0
        %604 = vmatpush1.msra.mxu0 0.0
        %605 = vmatprep.subr.mxu0 0.0
        %606 = vmatpush1.msra.mxu0 0.0
        %607 = vmatprep.subr.mxu0 0.0
        %608 = vmatpush1.msra.mxu0 0.0
        %609 = vmatprep.subr.mxu0 0.0
        %610 = vmatpush1.msra.mxu0 0.0
        %611 = vmatprep.subr.mxu0 0.0
        %612 = vmatpush1.msra.mxu0 0.0
        %613 = vmatprep.subr.mxu0 0.0
        %614 = vmatpush1.msra.mxu0 0.0
        %615 = vmatprep.subr.mxu0 0.0
        %616 = vmatpush1.msra.mxu0 0.0
        %617 = vmatprep.subr.mxu0 0.0
        %618 = vmatpush1.msra.mxu0 0.0
        %619 = vmatprep.subr.mxu0 0.0
        %620 = vmatpush1.msra.mxu0 0.0
        %621 = vmatprep.subr.mxu0 0.0
        %622 = vmatpush1.msra.mxu0 0.0
        %623 = vmatprep.subr.mxu0 0.0
        %624 = vmatpush1.msra.mxu0 0.0
        %625 = vmatprep.subr.mxu0 0.0
        %626 = vmatpush1.msra.mxu0 0.0
        %627 = vmatprep.subr.mxu0 0.0
        %628 = vmatpush1.msra.mxu0 0.0
        %629 = vmatprep.subr.mxu0 0.0
        %630 = vmatpush1.msra.mxu0 0.0
        %631 = vmatprep.subr.mxu0 0.0
        %632 = vmatpush1.msra.mxu0 0.0
        %633 = vmatprep.subr.mxu0 0.0
        %634 = vmatpush1.msra.mxu0 0.0
        %635 = vmatprep.subr.mxu0 0.0
        %636 = vmatpush1.msra.mxu0 0.0
        %637 = vmatprep.subr.mxu0 0.0
        %638 = vmatpush1.msra.mxu0 0.0
        %639 = vmatprep.subr.mxu0 0.0
        %640 = vmatpush1.msra.mxu0 0.0
        %641 = vmatprep.subr.mxu0 0.0
        %642 = vmatpush1.msra.mxu0 0.0
        %643 = vmatprep.mubr.f32.mxu0 0.0
        %644 = vmatmul.mubr.f32.gmra.mrb[0].mxu0 %v574
        %v645 = vpop.f32.mrb[0].mxu0
        %v646 = vadd.f32 %v565, %v645
        %v647 = vpop.f32.mrb[0].mxu0
        %648 = vmatprep.mubr.f32.mxu0 0.0
        %649 = vmatmul.mubr.f32.gmra.mrb[0].mxu0 %v577
        %v650 = vpop.f32.mrb[0].mxu0
        %v651 = vadd.f32 %v570, %v650
        %v652 = vpop.f32.mrb[0].mxu0
        %653 = vdwg.mxu0
        %v654 = vld [vmem:[%s6] sm:$0x1]
        %v656 = vlaneseq
        %v657 = vshrl.u32 %v656, 7
        %v658 = vsub.s32 0, %v657
        %v659 = vrot.slane %v654, %v658
        %v661 = vadd.f32 %v646, %v659
        %v662 = vadd.f32 %v651, %v659
        %v663 = vxor.u32 %v661, 2147483648
        %v664 = vxor.u32 %v662, 2147483648
        %v665 = vmul.f32 %v663, 1.442695
        %v666 = vpow.pop %v665
        %v667 = vmul.f32 %v664, 1.442695
        %v668 = vpow.pop %v667
        %v669 = vadd.f32 %v666, 1.0
        %v670 = vadd.f32 %v668, 1.0
        %v671 = vrcp.pop %v669
        %v672 = vmul.f32 1.0, %v671
        %v673 = vrcp.pop %v670
        %v674 = vmul.f32 1.0, %v673
        %v675 = vtanh.pop %v661
        %v676 = vtanh.pop %v662
        %v677 = vld [vmem:[%s318] sm:$0xff]
        %v678 = vld [vmem:[%s318 + $0x8] sm:$0xff]
        %681 = vrot.lane.b32.xlu0 %v677, 32
        %v682 = vpop.permute.xlu0 %681
        %683 = vrot.lane.b32.xlu0 %v678, 32
        %v684 = vpop.permute.xlu0 %683
        %v687 = vmul.f32 %v672, %v682
        %v688 = vmul.f32 %v674, %v684
        %691 = vrot.lane.b32.xlu0 %v675, 64
        %v692 = vpop.permute.xlu0 %691
        %693 = vrot.lane.b32.xlu0 %v676, 64
        %v694 = vpop.permute.xlu0 %693
        %v697 = vmul.f32 %v672, %v692
        %v698 = vmul.f32 %v674, %v694
        %701 = vrot.lane.b32.xlu0 %v697, 32
        %v702 = vpop.permute.xlu0 %701
        %703 = vrot.lane.b32.xlu0 %v698, 32
        %v704 = vpop.permute.xlu0 %703
        %v707 = vadd.f32 %v687, %v702
        %v708 = vadd.f32 %v688, %v704
        %711 = vrot.lane.b32.xlu0 %v707, 96
        %v712 = vpop.permute.xlu0 %711
        %713 = vrot.lane.b32.xlu0 %v708, 96
        %v714 = vpop.permute.xlu0 %713
        %717 = vst.msk [vmem:[%s370] sm:$0xff] %vm491, %v712
        %718 = vst.msk [vmem:[%s370 + $0x8] sm:$0xff] %vm491, %v714
        %s719 = sand.u32 %s196, 1
        %s720 = scalar_lea.sflag [#allocation4], %s719
        %s721 = sand.u32 %s196, 1
        %s722 = smul.addr %s721, 16
        %s723 = scalar_lea.vmem [#allocation10], %s722
        // Predicated region
        $region65: #{tpu_custom_call.1} parent=47 // pred_check
          %p724 = pneg %p206
        $region66: #{tpu_custom_call.1} parent=47 // pred_check_branch
          %726 = sbr.rel (%p724) target = $region68
        $region67: #{tpu_custom_call.1} parent=47 // pred_region
          %s728 = ssub.s32 256, 256
          %729 = vsyncadd %s720, %s728
          %s730 = smul.addr %s26, 2
          %s731 = smul.addr %s730, 128
          %s732 = scalar_lea.hbm %s7, %s731
          %s733 = sshll.u32 %s723, 4
          %s734 = int_to_ptr.vmem [resolvable:$true] %s733
          %739 = dma.vmem_to_hbm [thread:$0]  %s734, 256, %s732, %s720, 128, 128, 8
        $region68: #{tpu_custom_call.1} parent=47 // pred_fallthru
          _
      $region48: #{tpu_custom_call.1} parent=5 // pred_fallthru
        _
      %p740 = scmp.le.s32.totalorder 2, %s21
      // Predicated region
      $region69: #{tpu_custom_call.1} parent=5 // pred_check
        %p741 = pneg %p740
      $region70: #{tpu_custom_call.1} parent=5 // pred_check_branch
        %743 = sbr.rel (%p741) target = $region72
      $region71: #{tpu_custom_call.1} parent=5 // pred_region
        %s744 = ssub.s32 %s21, 2
        // Predicated region
        $region73: #{tpu_custom_call.1} parent=71 // pred_check
          %p745 = pneg %p212
        $region74: #{tpu_custom_call.1} parent=71 // pred_check_branch
          %747 = sbr.rel (%p745) target = $region76
        $region75: #{tpu_custom_call.1} parent=71 // pred_region
          %s748 = sand.u32 %s197, 1
          %s749 = scalar_lea.sflag [#allocation4], %s748
          %s750 = sand.u32 %s197, 1
          %s751 = smul.addr %s750, 16
          %s752 = scalar_lea.vmem [#allocation10], %s751
          %753 = dma.done %s749, 256
        $region76: #{tpu_custom_call.1} parent=71 // pred_fallthru
          _
      $region72: #{tpu_custom_call.1} parent=5 // pred_fallthru
        _
    $region6: #{tpu_custom_call.1} parent=1 // loop_footer
      %s25 = sadd.s32 1, %s21
    $region7: #{tpu_custom_call.1} parent=1 // loop_footer_branch
      %20 = sbr.rel target = $region3
    $region8: #{tpu_custom_call.1} parent=1 // loop_exit
      _
    %754 = vsyncpa [#allocation3], 1
    %s755 = scalar_lea.sflag [#allocation3], 1
    %756 = vsyncpa %s755, 1
    %757 = vsyncpa [#allocation6], 1
    %758 = vsyncpa [#allocation9], 1
    %759 = vsyncpa [#allocation4], 1
    %s760 = scalar_lea.sflag [#allocation4], 1
    %761 = vsyncpa %s760, 1

</llo_original>
